<compile_context>
chip_gen: v6e
topology: v6e:2x2x1
jax: 0.10.0
libtpu: 0.0.40
codegen_flags: <defaults>
</compile_context>

<pallas_src>
import functools

import jax
import jax.numpy as jnp
from jax import lax
from jax.experimental import pallas as pl
from jax.experimental.pallas import tpu as pltpu


def _round_up(v, m):
    return (v + m - 1) // m * m


def _conv_embed_ln_kernel(p_ref, w_ref, b_ref, g_ref, beta_ref, o_ref, *, eps):
    """Fused (im2col conv matmul) + bias + LayerNorm for one tile of rows.

    p_ref:    (TM, K)   patch rows (compute dtype, e.g. bf16)
    w_ref:    (K, E)    conv weight, K-major
    b_ref:    (1, E)    conv bias   (f32)
    g_ref:    (1, E)    LN gamma    (f32)
    beta_ref: (1, E)    LN beta     (f32)
    o_ref:    (TM, E)   output tokens (true E, full-extent lane dim)
    """
    # MXU matmul with f32 accumulation.
    y = jnp.dot(p_ref[...], w_ref[...], preferred_element_type=jnp.float32)
    y = y + b_ref[...]                                   # (TM, E), f32

    e = y.shape[-1]
    inv_e = 1.0 / e
    # Two-pass LayerNorm (matches PyTorch), reductions go to the XLU slot.
    mean = jnp.sum(y, axis=-1, keepdims=True) * inv_e
    cent = y - mean
    var = jnp.sum(cent * cent, axis=-1, keepdims=True) * inv_e
    y_hat = cent * lax.rsqrt(var + eps)                  # rsqrt -> EUP slot
    out = y_hat * g_ref[...] + beta_ref[...]

    o_ref[...] = out.astype(o_ref.dtype)


def _im2col_nchw(x, kh, kw, stride, padding):
    """Extract conv patches from NCHW input. Returns (B, H_out*W_out, C*kh*kw)."""
    B, C, H, W = x.shape
    H_out = (H + 2 * padding - kh) // stride + 1
    W_out = (W + 2 * padding - kw) // stride + 1
    xp = jnp.pad(x, ((0, 0), (0, 0), (padding, padding), (padding, padding)))

    pieces = []
    for i in range(kh):
        for j in range(kw):
            pieces.append(
                xp[:, :, i:i + stride * H_out:stride, j:j + stride * W_out:stride]
            )  # (B, C, H_out, W_out)
    # (B, C, kh*kw, H_out, W_out) -> (B, H_out, W_out, C, kh*kw) -> (B, S, C*kh*kw)
    pat = jnp.stack(pieces, axis=2)
    pat = pat.transpose(0, 3, 4, 1, 2).reshape(B, H_out * W_out, C * kh * kw)
    return pat, H_out, W_out


def conv_embedd_forward(x, conv_w, conv_b, ln_gamma, ln_beta,
                        *, stride, padding, eps=1e-5,
                        tile_m=1024, compute_dtype=jnp.bfloat16):
    """Forward pass of conv_embedd.

    x:       (B, C, H, W)      NCHW, like PyTorch
    conv_w:  (E, C, kh, kw)    torch Conv2d weight layout
    conv_b:  (E,)
    ln_gamma, ln_beta: (E,)
    Returns: (tokens (B, H_out*W_out, E), H_out, W_out)
    """
    E, C, kh, kw = conv_w.shape
    out_dtype = x.dtype

    # Cast before im2col so the patch tensor (and all im2col intermediates)
    # are materialized in the narrow compute dtype.
    x_c = x if compute_dtype == x.dtype else x.astype(compute_dtype)
    patches, H_out, W_out = _im2col_nchw(x_c, kh, kw, stride, padding)
    B, S, K = patches.shape

    # Flatten (B, S) -> M rows; matmul + LayerNorm are purely per-row.
    M = B * S
    TM = max(8, min(_round_up(tile_m, 8), _round_up(M, 8)))
    M_pad = _round_up(M, TM)

    p2d = patches.reshape(M, K)
    if M_pad != M:
        p2d = jnp.pad(p2d, ((0, M_pad - M), (0, 0)))

    # (E, C, kh, kw) -> (E, K) -> (K, E); K ordering (C major, kh*kw minor)
    # matches the patch construction above.
    w2d = conv_w.reshape(E, K).T.astype(compute_dtype)
    b2d = conv_b.astype(jnp.float32).reshape(1, E)
    g2d = ln_gamma.astype(jnp.float32).reshape(1, E)
    beta2d = ln_beta.astype(jnp.float32).reshape(1, E)

    kernel = functools.partial(_conv_embed_ln_kernel, eps=eps)

    out = pl.pallas_call(
        kernel,
        out_shape=jax.ShapeDtypeStruct((M_pad, E), out_dtype),
        grid_spec=pltpu.PrefetchScalarGridSpec(
            num_scalar_prefetch=0,
            grid=(M_pad // TM,),
            in_specs=[
                pl.BlockSpec((TM, K), lambda i: (i, 0)),   # patch rows (streamed)
                pl.BlockSpec((K, E), lambda i: (0, 0)),    # weight (resident)
                pl.BlockSpec((1, E), lambda i: (0, 0)),    # bias   (resident)
                pl.BlockSpec((1, E), lambda i: (0, 0)),    # gamma  (resident)
                pl.BlockSpec((1, E), lambda i: (0, 0)),    # beta   (resident)
            ],
            out_specs=pl.BlockSpec((TM, E), lambda i: (i, 0)),
        ),
        compiler_params=pltpu.CompilerParams(
            dimension_semantics=("parallel",),
            # Explicit scoped-VMEM budget (generous headroom; per-step usage
            # is < 2 MiB even at tile_m=1024, fits v5e/v6e/v7x defaults).
            vmem_limit_bytes=32 * 1024 * 1024,
        ),
    )(p2d, w2d, b2d, g2d, beta2d)

    tokens = out[:M] if M_pad != M else out
    tokens = tokens.reshape(B, S, E)
    return tokens, H_out, W_out


def _reference_forward(x, conv_w, conv_b, ln_gamma, ln_beta,
                       *, stride, padding, eps=1e-5):
    """Pure-JAX reference (matches PyTorch semantics) for validation."""
    y = lax.conv_general_dilated(
        x, conv_w, window_strides=(stride, stride),
        padding=((padding, padding), (padding, padding)),
        dimension_numbers=("NCHW", "OIHW", "NCHW"),
    ) + conv_b[None, :, None, None]
    B, E, H_out, W_out = y.shape
    tok = y.transpose(0, 2, 3, 1).reshape(B, H_out * W_out, E)
    mean = tok.mean(-1, keepdims=True)
    var = ((tok - mean) ** 2).mean(-1, keepdims=True)
    tok = (tok - mean) / jnp.sqrt(var + eps) * ln_gamma + ln_beta
    return tok, H_out, W_out


if __name__ == "__main__":
    # Small shapes consistent with the module: Conv2d(in_ch=4, embed_dim=32,
    # kernel_size=3, stride=2, padding=1) on a (2, 4, 16, 16) input.
    B, C, H, W = 2, 4, 16, 16
    E, ksz, stride, padding = 32, 3, 2, 1

    key = jax.random.PRNGKey(0)
    kx, kw_, kb = jax.random.split(key, 3)

    x = jax.random.normal(kx, (B, C, H, W), dtype=jnp.float32)
    # Deterministic parameter init (synthetic, not a checkpoint).
    fan_in = C * ksz * ksz
    conv_w = jax.random.normal(kw_, (E, C, ksz, ksz), dtype=jnp.float32) / jnp.sqrt(fan_in)
    conv_b = jax.random.normal(kb, (E,), dtype=jnp.float32) * 0.01
    ln_gamma = jnp.ones((E,), dtype=jnp.float32)
    ln_beta = jnp.zeros((E,), dtype=jnp.float32)

    ref, H_ref, W_ref = _reference_forward(
        x, conv_w, conv_b, ln_gamma, ln_beta, stride=stride, padding=padding)

    # 1) f32 compute path: tight check of the fused kernel logic.
    #    tile_m=32 -> 4 grid steps even at this toy size (exercises pipelining).
    out32, H_out, W_out = conv_embedd_forward(
        x, conv_w, conv_b, ln_gamma, ln_beta, stride=stride, padding=padding,
        tile_m=32, compute_dtype=jnp.float32)
    out32 = jax.block_until_ready(out32)
    assert (H_out, W_out) == (H_ref, W_ref) == (8, 8)
    assert out32.shape == (B, H_out * W_out, E)
    assert jnp.allclose(out32, ref, atol=1e-4, rtol=1e-4), "f32 mismatch vs reference"

    # 2) Default bf16 matmul-operand path (MXU-native on v5e/v6e/v7x):
    #    looser tolerance, LN statistics stay f32.
    outbf, H2, W2 = conv_embedd_forward(
        x, conv_w, conv_b, ln_gamma, ln_beta, stride=stride, padding=padding,
        tile_m=32)
    outbf = jax.block_until_ready(outbf)
    assert (H2, W2) == (8, 8) and outbf.shape == (B, H_out * W_out, E)
    assert jnp.allclose(outbf, ref, atol=3e-2, rtol=3e-2), "bf16 mismatch vs reference"

    # 3) Default tile size (single grid step at this toy size) also runs clean.
    outd, _, _ = conv_embedd_forward(
        x, conv_w, conv_b, ln_gamma, ln_beta, stride=stride, padding=padding)
    outd = jax.block_until_ready(outd)
    assert jnp.allclose(outd, ref, atol=3e-2, rtol=3e-2), "default-path mismatch"

    print("KERNEL_OK")
</pallas_src>

<mosaic_0001>
module attributes {stable_mosaic.version = 11 : i64} {
  func.func @_conv_embed_ln_kernel(%arg0: i32, %arg1: memref<32x36xf32, #tpu.memory_space<vmem>>, %arg2: memref<36x32xf32, #tpu.memory_space<vmem>>, %arg3: memref<1x32xf32, #tpu.memory_space<vmem>>, %arg4: memref<1x32xf32, #tpu.memory_space<vmem>>, %arg5: memref<1x32xf32, #tpu.memory_space<vmem>>, %arg6: memref<32x32xf32, #tpu.memory_space<vmem>>) attributes {dimension_semantics = [#tpu.dimension_semantics<parallel>], iteration_bounds = array<i64: 4>, scalar_prefetch = 0 : i64, scratch_operands = 0 : i64, tpu.core_type = #tpu.core_type<tc>, window_params = [{transform_indices = @transform_0, window_bounds = array<i64: 32, 36>}, {pipeline_mode = #tpu.pipeline_mode<synchronous>, transform_indices = @transform_1, window_bounds = array<i64: 36, 32>}, {pipeline_mode = #tpu.pipeline_mode<synchronous>, transform_indices = @transform_2, window_bounds = array<i64: 1, 32>}, {pipeline_mode = #tpu.pipeline_mode<synchronous>, transform_indices = @transform_3, window_bounds = array<i64: 1, 32>}, {pipeline_mode = #tpu.pipeline_mode<synchronous>, transform_indices = @transform_4, window_bounds = array<i64: 1, 32>}, {transform_indices = @transform_5, window_bounds = array<i64: 32, 32>}]} {
    %c0 = arith.constant 0 : index
    %c0_0 = arith.constant 0 : index
    %0 = vector.load %arg1[%c0, %c0_0] : memref<32x36xf32, #tpu.memory_space<vmem>>, vector<32x36xf32>
    %c0_1 = arith.constant 0 : index
    %c0_2 = arith.constant 0 : index
    %1 = vector.load %arg2[%c0_1, %c0_2] : memref<36x32xf32, #tpu.memory_space<vmem>>, vector<36x32xf32>
    %cst = arith.constant dense<0.000000e+00> : vector<32x32xf32>
    %2 = tpu.matmul %0, %1, %cst {dimension_numbers = #tpu.dot_dimension_numbers<[1], [0], [0], [1], [0, 0, 1, 1], [], []>} : vector<32x36xf32>, vector<36x32xf32>, vector<32x32xf32> -> vector<32x32xf32>
    %c0_3 = arith.constant 0 : index
    %c0_4 = arith.constant 0 : index
    %3 = vector.load %arg3[%c0_3, %c0_4] : memref<1x32xf32, #tpu.memory_space<vmem>>, vector<1x32xf32>
    %4 = vector.broadcast %3 : vector<1x32xf32> to vector<32x32xf32>
    %5 = arith.addf %2, %4 : vector<32x32xf32>
    %cst_5 = arith.constant dense<0.000000e+00> : vector<32xf32>
    %6 = vector.multi_reduction <add>, %5, %cst_5 [1] : vector<32x32xf32> to vector<32xf32>
    %7 = vector.shape_cast %6 : vector<32xf32> to vector<32x1xf32>
    %cst_6 = arith.constant 3.125000e-02 : f32
    %8 = vector.broadcast %cst_6 : f32 to vector<32x1xf32>
    %9 = arith.mulf %7, %8 : vector<32x1xf32>
    %10 = vector.broadcast %9 : vector<32x1xf32> to vector<32x32xf32>
    %11 = arith.subf %5, %10 : vector<32x32xf32>
    %12 = arith.mulf %11, %11 : vector<32x32xf32>
    %cst_7 = arith.constant dense<0.000000e+00> : vector<32xf32>
    %13 = vector.multi_reduction <add>, %12, %cst_7 [1] : vector<32x32xf32> to vector<32xf32>
    %14 = vector.shape_cast %13 : vector<32xf32> to vector<32x1xf32>
    %cst_8 = arith.constant 3.125000e-02 : f32
    %15 = vector.broadcast %cst_8 : f32 to vector<32x1xf32>
    %16 = arith.mulf %14, %15 : vector<32x1xf32>
    %cst_9 = arith.constant 9.99999974E-6 : f32
    %17 = vector.broadcast %cst_9 : f32 to vector<32x1xf32>
    %18 = arith.addf %16, %17 : vector<32x1xf32>
    %19 = math.rsqrt %18 : vector<32x1xf32>
    %20 = vector.broadcast %19 : vector<32x1xf32> to vector<32x32xf32>
    %21 = arith.mulf %11, %20 : vector<32x32xf32>
    %c0_10 = arith.constant 0 : index
    %c0_11 = arith.constant 0 : index
    %22 = vector.load %arg4[%c0_10, %c0_11] : memref<1x32xf32, #tpu.memory_space<vmem>>, vector<1x32xf32>
    %23 = vector.broadcast %22 : vector<1x32xf32> to vector<32x32xf32>
    %24 = arith.mulf %21, %23 : vector<32x32xf32>
    %c0_12 = arith.constant 0 : index
    %c0_13 = arith.constant 0 : index
    %25 = vector.load %arg5[%c0_12, %c0_13] : memref<1x32xf32, #tpu.memory_space<vmem>>, vector<1x32xf32>
    %26 = vector.broadcast %25 : vector<1x32xf32> to vector<32x32xf32>
    %27 = arith.addf %24, %26 : vector<32x32xf32>
    %c0_14 = arith.constant 0 : index
    %c0_15 = arith.constant 0 : index
    %28 = vector.load %arg6[%c0_14, %c0_15] : memref<32x32xf32, #tpu.memory_space<vmem>>, vector<32x32xf32>
    tpu.vector_store %arg6[%c0_14, %c0_15], %27 {strides = array<i32>} : memref<32x32xf32, #tpu.memory_space<vmem>>, vector<32x32xf32>,
    return
  }
  func.func @transform_0(%arg0: i32) -> (i32, i32) {
    %c0_i32 = arith.constant 0 : i32
    %c0_i32_0 = arith.constant 0 : i32
    return %arg0, %c0_i32 : i32, i32
  }
  func.func @transform_1(%arg0: i32) -> (i32, i32) {
    %c0_i32 = arith.constant 0 : i32
    %c0_i32_0 = arith.constant 0 : i32
    %c0_i32_1 = arith.constant 0 : i32
    return %c0_i32, %c0_i32_0 : i32, i32
  }
  func.func @transform_2(%arg0: i32) -> (i32, i32) {
    %c0_i32 = arith.constant 0 : i32
    %c0_i32_0 = arith.constant 0 : i32
    %c0_i32_1 = arith.constant 0 : i32
    return %c0_i32, %c0_i32_0 : i32, i32
  }
  func.func @transform_3(%arg0: i32) -> (i32, i32) {
    %c0_i32 = arith.constant 0 : i32
    %c0_i32_0 = arith.constant 0 : i32
    %c0_i32_1 = arith.constant 0 : i32
    return %c0_i32, %c0_i32_0 : i32, i32
  }
  func.func @transform_4(%arg0: i32) -> (i32, i32) {
    %c0_i32 = arith.constant 0 : i32
    %c0_i32_0 = arith.constant 0 : i32
    %c0_i32_1 = arith.constant 0 : i32
    return %c0_i32, %c0_i32_0 : i32, i32
  }
  func.func @transform_5(%arg0: i32) -> (i32, i32) {
    %c0_i32 = arith.constant 0 : i32
    %c0_i32_0 = arith.constant 0 : i32
    return %arg0, %c0_i32 : i32, i32
  }
}

</mosaic_0001>

<llo_original>
// kernel: tpu_custom_call.1
$region0: #{tpu_custom_call.1}
  #allocation0 [shape = 'u32[]', space=smem, size = 0x4, offset = 0x4, fixed_abs, tag = 'smem constant byte address 0x4 - core index']
  #allocation1 [shape = 'u32[144,128]{1,0:T(1,128)}', space=vmem, size = 0x12000, scoped, tag = 'internal scratch']
  %s0 = inlined_call_operand.vmem [shape: f32[128,36], index: 0, kind: input, shape index: {}]
  %s1 = inlined_call_operand.vmem [shape: f32[36,32], index: 1, kind: input, shape index: {}]
  %s2 = inlined_call_operand.vmem [shape: f32[1,32], index: 2, kind: input, shape index: {}]
  %s3 = inlined_call_operand.vmem [shape: f32[1,32], index: 3, kind: input, shape index: {}]
  %s4 = inlined_call_operand.vmem [shape: f32[1,32], index: 4, kind: input, shape index: {}]
  %s5 = inlined_call_operand.vmem [shape: f32[128,32], index: 5, kind: output, shape index: {}]
  %s6 = sld [smem:[#allocation0]]
  $region53: #{tpu_custom_call.1} parent=0
    _
  %s8 = ssub.s32 1, %s6
  %s9 = scalar_select 0, %s8, %s6
  loop: start=0, step=1, limit=6
  $region2: #{tpu_custom_call.1} parent=0 // loop_pre_header
    _
  $region3: #{tpu_custom_call.1} parent=0 // loop_header
    %s11 = sphi 0, %s15
    %p12 = scmp.ge.s32.totalorder %s11, 6
    %s21 = sphi 0, %s23
    %s24 = sphi 0, %s21
    %s25 = sphi 0, %s24
    %s41 = sphi 0, %s25
    %s45 = sphi 0, %s45
    %s47 = sphi 0, %s45
    %s48 = sphi 0, %s47
    %s62 = sphi 0, %s48
    %s66 = sphi 0, %s66
    %s68 = sphi 0, %s66
    %s69 = sphi 0, %s68
    %s83 = sphi 0, %s69
    %s87 = sphi 0, %s87
    %s89 = sphi 0, %s87
    %s90 = sphi 0, %s89
    %s104 = sphi 0, %s90
    %s108 = sphi 0, %s108
    %s110 = sphi 0, %s108
    %s111 = sphi 0, %s110
    %s125 = sphi 0, %s111
    %s131 = sphi 0, %s133
    %s134 = sphi 0, %s131
    %s135 = sphi 0, %s134
    %s151 = sphi 0, %s135
  $region4: #{tpu_custom_call.1} parent=0 // loop_header_branch
    %14 = sbr.rel (%p12) target = $region8
  $region5: #{tpu_custom_call.1} parent=0 // loop_body
    %s16 = ssub.s32 %s11, 1
    %s17 = ssub.s32 %s11, 2
    %s18 = sadd.s32 %s11, 1
    %s19 = ssub.s32 %s11, %s18
    %p20 = scmp.eq.s32.totalorder %s19, 0
    %s22 = sadd.s32 %s21, 1
    %s23 = scalar_select %p20, %s21, %s22
    %p26 = pneg %p20
    %p27 = scmp.eq.s32.totalorder %s11, 3
    %p28 = por %p26, %p27
    %p29 = scmp.ne.s32.totalorder %s21, %s24
    %p30 = scmp.eq.s32.totalorder %s11, 0
    %p31 = por %p29, %p30
    %p32 = scmp.ne.s32.totalorder %s21, %s24
    %p33 = scmp.eq.s32.totalorder %s16, 3
    %p34 = por %p32, %p33
    %p35 = scmp.ne.s32.totalorder %s24, %s25
    %p36 = scmp.eq.s32.totalorder %s16, 0
    %p37 = por %p35, %p36
    %p38 = scmp.ne.s32.totalorder %s24, %s25
    %p39 = scmp.eq.s32.totalorder %s17, 3
    %p40 = por %p38, %p39
    %p42 = scmp.ne.s32.totalorder %s25, %s41
    %p43 = scmp.eq.s32.totalorder %s17, 0
    %p44 = por %p42, %p43
    %s46 = sadd.s32 %s45, 1
    %p49 = scmp.eq.s32.totalorder %s11, 3
    %p50 = scmp.ne.s32.totalorder %s45, %s47
    %p51 = scmp.eq.s32.totalorder %s11, 0
    %p52 = por %p50, %p51
    %p53 = scmp.ne.s32.totalorder %s45, %s47
    %p54 = scmp.eq.s32.totalorder %s16, 3
    %p55 = por %p53, %p54
    %p56 = scmp.ne.s32.totalorder %s47, %s48
    %p57 = scmp.eq.s32.totalorder %s16, 0
    %p58 = por %p56, %p57
    %p59 = scmp.ne.s32.totalorder %s47, %s48
    %p60 = scmp.eq.s32.totalorder %s17, 3
    %p61 = por %p59, %p60
    %p63 = scmp.ne.s32.totalorder %s48, %s62
    %p64 = scmp.eq.s32.totalorder %s17, 0
    %p65 = por %p63, %p64
    %s67 = sadd.s32 %s66, 1
    %p70 = scmp.eq.s32.totalorder %s11, 3
    %p71 = scmp.ne.s32.totalorder %s66, %s68
    %p72 = scmp.eq.s32.totalorder %s11, 0
    %p73 = por %p71, %p72
    %p74 = scmp.ne.s32.totalorder %s66, %s68
    %p75 = scmp.eq.s32.totalorder %s16, 3
    %p76 = por %p74, %p75
    %p77 = scmp.ne.s32.totalorder %s68, %s69
    %p78 = scmp.eq.s32.totalorder %s16, 0
    %p79 = por %p77, %p78
    %p80 = scmp.ne.s32.totalorder %s68, %s69
    %p81 = scmp.eq.s32.totalorder %s17, 3
    %p82 = por %p80, %p81
    %p84 = scmp.ne.s32.totalorder %s69, %s83
    %p85 = scmp.eq.s32.totalorder %s17, 0
    %p86 = por %p84, %p85
    %s88 = sadd.s32 %s87, 1
    %p91 = scmp.eq.s32.totalorder %s11, 3
    %p92 = scmp.ne.s32.totalorder %s87, %s89
    %p93 = scmp.eq.s32.totalorder %s11, 0
    %p94 = por %p92, %p93
    %p95 = scmp.ne.s32.totalorder %s87, %s89
    %p96 = scmp.eq.s32.totalorder %s16, 3
    %p97 = por %p95, %p96
    %p98 = scmp.ne.s32.totalorder %s89, %s90
    %p99 = scmp.eq.s32.totalorder %s16, 0
    %p100 = por %p98, %p99
    %p101 = scmp.ne.s32.totalorder %s89, %s90
    %p102 = scmp.eq.s32.totalorder %s17, 3
    %p103 = por %p101, %p102
    %p105 = scmp.ne.s32.totalorder %s90, %s104
    %p106 = scmp.eq.s32.totalorder %s17, 0
    %p107 = por %p105, %p106
    %s109 = sadd.s32 %s108, 1
    %p112 = scmp.eq.s32.totalorder %s11, 3
    %p113 = scmp.ne.s32.totalorder %s108, %s110
    %p114 = scmp.eq.s32.totalorder %s11, 0
    %p115 = por %p113, %p114
    %p116 = scmp.ne.s32.totalorder %s108, %s110
    %p117 = scmp.eq.s32.totalorder %s16, 3
    %p118 = por %p116, %p117
    %p119 = scmp.ne.s32.totalorder %s110, %s111
    %p120 = scmp.eq.s32.totalorder %s16, 0
    %p121 = por %p119, %p120
    %p122 = scmp.ne.s32.totalorder %s110, %s111
    %p123 = scmp.eq.s32.totalorder %s17, 3
    %p124 = por %p122, %p123
    %p126 = scmp.ne.s32.totalorder %s111, %s125
    %p127 = scmp.eq.s32.totalorder %s17, 0
    %p128 = por %p126, %p127
    %s129 = ssub.s32 %s11, %s18
    %p130 = scmp.eq.s32.totalorder %s129, 0
    %s132 = sadd.s32 %s131, 1
    %s133 = scalar_select %p130, %s131, %s132
    %p136 = pneg %p130
    %p137 = scmp.eq.s32.totalorder %s11, 3
    %p138 = por %p136, %p137
    %p139 = scmp.ne.s32.totalorder %s131, %s134
    %p140 = scmp.eq.s32.totalorder %s11, 0
    %p141 = por %p139, %p140
    %p142 = scmp.ne.s32.totalorder %s131, %s134
    %p143 = scmp.eq.s32.totalorder %s16, 3
    %p144 = por %p142, %p143
    %p145 = scmp.ne.s32.totalorder %s134, %s135
    %p146 = scmp.eq.s32.totalorder %s16, 0
    %p147 = por %p145, %p146
    %p148 = scmp.ne.s32.totalorder %s134, %s135
    %p149 = scmp.eq.s32.totalorder %s17, 3
    %p150 = por %p148, %p149
    %p152 = scmp.ne.s32.totalorder %s135, %s151
    %p153 = scmp.eq.s32.totalorder %s17, 0
    %p154 = por %p152, %p153
    %p155 = scmp.le.s32.totalorder 1, %s11
    %p156 = scmp.lt.s32.totalorder %s11, 5
    %p157 = pnand %p155, %p156
    %p158 = pneg %p157
    // Predicated region
    $region9: #{tpu_custom_call.1} parent=5 // pred_check
      _
    $region10: #{tpu_custom_call.1} parent=5 // pred_check_branch
      %160 = sbr.rel (%p157) target = $region12
    $region11: #{tpu_custom_call.1} parent=5 // pred_region
      %s161 = ssub.s32 %s11, 1
      // Predicated region
      $region13: #{tpu_custom_call.1} parent=11 // pred_check
        %p162 = pneg %p58
      $region14: #{tpu_custom_call.1} parent=11 // pred_check_branch
        %164 = sbr.rel (%p162) target = $region16
      $region15: #{tpu_custom_call.1} parent=11 // pred_region
        _
      $region16: #{tpu_custom_call.1} parent=11 // pred_fallthru
        _
      // Predicated region
      $region17: #{tpu_custom_call.1} parent=11 // pred_check
        %p165 = pneg %p79
      $region18: #{tpu_custom_call.1} parent=11 // pred_check_branch
        %167 = sbr.rel (%p165) target = $region20
      $region19: #{tpu_custom_call.1} parent=11 // pred_region
        _
      $region20: #{tpu_custom_call.1} parent=11 // pred_fallthru
        _
      // Predicated region
      $region21: #{tpu_custom_call.1} parent=11 // pred_check
        %p168 = pneg %p100
      $region22: #{tpu_custom_call.1} parent=11 // pred_check_branch
        %170 = sbr.rel (%p168) target = $region24
      $region23: #{tpu_custom_call.1} parent=11 // pred_region
        _
      $region24: #{tpu_custom_call.1} parent=11 // pred_fallthru
        _
      // Predicated region
      $region25: #{tpu_custom_call.1} parent=11 // pred_check
        %p171 = pneg %p121
      $region26: #{tpu_custom_call.1} parent=11 // pred_check_branch
        %173 = sbr.rel (%p171) target = $region28
      $region27: #{tpu_custom_call.1} parent=11 // pred_region
        _
      $region28: #{tpu_custom_call.1} parent=11 // pred_fallthru
        _
    $region12: #{tpu_custom_call.1} parent=5 // pred_fallthru
      _
    %p174 = scmp.lt.s32.totalorder %s11, 4
    // Predicated region
    $region29: #{tpu_custom_call.1} parent=5 // pred_check
      %p175 = pneg %p174
    $region30: #{tpu_custom_call.1} parent=5 // pred_check_branch
      %177 = sbr.rel (%p175) target = $region32
    $region31: #{tpu_custom_call.1} parent=5 // pred_region
      // Predicated region
      $region33: #{tpu_custom_call.1} parent=31 // pred_check
        %p178 = pneg %p31
      $region34: #{tpu_custom_call.1} parent=31 // pred_check_branch
        %180 = sbr.rel (%p178) target = $region36
      $region35: #{tpu_custom_call.1} parent=31 // pred_region
        %s181 = smul.u32 4, %s11
        %p182 = scmp.lt.s32.totalorder %s181, 15
        %s183 = scalar_select %p182, %s181, 15
        %s184 = smul.addr %s183, 8
        %s185 = scalar_lea.vmem %s0, %s184
        %s186 = smul.u32 4, %s11
      $region36: #{tpu_custom_call.1} parent=31 // pred_fallthru
        _
    $region32: #{tpu_custom_call.1} parent=5 // pred_fallthru
      _
    %p187 = scmp.le.s32.totalorder 1, %s11
    %p188 = scmp.lt.s32.totalorder %s11, 5
    %p189 = pnand %p187, %p188
    %p190 = pneg %p189
    // Predicated region
    $region37: #{tpu_custom_call.1} parent=5 // pred_check
      _
    $region38: #{tpu_custom_call.1} parent=5 // pred_check_branch
      %192 = sbr.rel (%p189) target = $region40
    $region39: #{tpu_custom_call.1} parent=5 // pred_region
      %s193 = ssub.s32 %s11, 1
      %s194 = smul.u32 4, %s16
      %p195 = scmp.lt.s32.totalorder %s194, 15
      %s196 = scalar_select %p195, %s194, 15
      %s197 = smul.addr %s196, 8
      %s198 = scalar_lea.vmem %s0, %s197
      %p199 = pneg %p37
      %p200 = pneg %p34
      %p201 = pneg %p58
      %p202 = pneg %p55
      %p203 = pneg %p79
      %p204 = pneg %p76
      %p205 = pneg %p100
      %p206 = pneg %p97
      %p207 = pneg %p121
      %p208 = pneg %p118
      %p209 = pneg %p147
      %p210 = pneg %p144
      %s211 = smul.u32 4, %s16
      %p212 = scmp.lt.s32.totalorder %s211, 15
      %s213 = scalar_select %p212, %s211, 15
      %s214 = smul.addr %s213, 8
      %s215 = scalar_lea.vmem %s5, %s214
      %s216 = smul.u32 4, %s16
      %p217 = scmp.lt.s32.totalorder %s216, 15
      %s218 = scalar_select %p217, %s216, 15
      %s219 = smul.addr %s218, 8
      %s220 = scalar_lea.vmem %s0, %s219
      %s221 = smul.u32 4, %s16
      %s222 = smul.u32 4, %s16
      %p223 = scmp.lt.s32.totalorder %s222, 15
      %s224 = scalar_select %p223, %s222, 15
      %s225 = smul.addr %s224, 8
      %s226 = scalar_lea.vmem %s5, %s225
      %s227 = smul.u32 4, %s16
      %v228 = vld [vmem:[%s220] sm:$0xff]
      %v229 = vld [vmem:[%s220 + $0x8] sm:$0xff]
      %v230 = vld [vmem:[%s220 + $0x10] sm:$0xff]
      %v231 = vld [vmem:[%s220 + $0x18] sm:$0xff]
      %v232 = vld [vmem:[%s1] sm:$0xff]
      %v233 = vld [vmem:[%s1 + $0x8] sm:$0xff]
      %v234 = vld [vmem:[%s1 + $0x10] sm:$0xff]
      %v235 = vld [vmem:[%s1 + $0x18] sm:$0xff]
      %v236 = vld [vmem:[%s1 + $0x20] sm:$0xf]
      %v237 = vld [vmem:[%s2] sm:$0x1]
      %v239 = vlaneseq
      %v240 = vshrl.u32 %v239, 7
      %v241 = vsub.s32 0, %v240
      %v242 = vrot.slane %v237, %v241
      %vm244 = vcmask 293888
      %v246 = vsel %vm244, %v228, 0
      %v249 = vsel %vm244, %v229, 0
      %v252 = vsel %vm244, %v230, 0
      %v255 = vsel %vm244, %v231, 0
      %vm257 = vcmask 1043456
      %v259 = vsel %vm257, %v236, 0
      %261 = vmatprep.subr.mxu0 0.0
      %262 = vmatpush1.msra.mxu0 0.0
      %263 = vmatprep.subr.mxu0 0.0
      %264 = vmatpush1.msra.mxu0 0.0
      %265 = vmatprep.subr.mxu0 0.0
      %266 = vmatpush1.msra.mxu0 0.0
      %267 = vmatprep.subr.mxu0 0.0
      %268 = vmatpush1.msra.mxu0 0.0
      %269 = vmatprep.subr.mxu0 0.0
      %270 = vmatpush1.msra.mxu0 0.0
      %271 = vmatprep.subr.mxu0 0.0
      %272 = vmatpush1.msra.mxu0 0.0
      %273 = vmatprep.subr.mxu0 0.0
      %274 = vmatpush1.msra.mxu0 0.0
      %275 = vmatprep.subr.mxu0 0.0
      %276 = vmatpush1.msra.mxu0 0.0
      %277 = vmatprep.subr.mxu0 0.0
      %278 = vmatpush1.msra.mxu0 0.0
      %279 = vmatprep.subr.mxu0 0.0
      %280 = vmatpush1.msra.mxu0 0.0
      %281 = vmatprep.subr.mxu0 0.0
      %282 = vmatpush1.msra.mxu0 0.0
      %283 = vmatprep.subr.mxu0 0.0
      %284 = vmatpush1.msra.mxu0 %v259
      %285 = vmatprep.subr.mxu0 0.0
      %286 = vmatpush1.msra.mxu0 %v235
      %287 = vmatprep.subr.mxu0 0.0
      %288 = vmatpush1.msra.mxu0 %v234
      %289 = vmatprep.subr.mxu0 0.0
      %290 = vmatpush1.msra.mxu0 %v233
      %291 = vmatprep.subr.mxu0 0.0
      %292 = vmatpush1.msra.mxu0 %v232
      %293 = vmatprep.subr.mxu0 0.0
      %294 = vmatpush2.msra.mxu0 0.0
      %295 = vmatprep.subr.mxu0 0.0
      %296 = vmatpush2.msra.mxu0 0.0
      %297 = vmatprep.subr.mxu0 0.0
      %298 = vmatpush2.msra.mxu0 0.0
      %299 = vmatprep.subr.mxu0 0.0
      %300 = vmatpush2.msra.mxu0 0.0
      %301 = vmatprep.subr.mxu0 0.0
      %302 = vmatpush2.msra.mxu0 0.0
      %303 = vmatprep.subr.mxu0 0.0
      %304 = vmatpush2.msra.mxu0 0.0
      %305 = vmatprep.subr.mxu0 0.0
      %306 = vmatpush2.msra.mxu0 0.0
      %307 = vmatprep.subr.mxu0 0.0
      %308 = vmatpush2.msra.mxu0 0.0
      %309 = vmatprep.subr.mxu0 0.0
      %310 = vmatpush2.msra.mxu0 0.0
      %311 = vmatprep.subr.mxu0 0.0
      %312 = vmatpush2.msra.mxu0 0.0
      %313 = vmatprep.subr.mxu0 0.0
      %314 = vmatpush2.msra.mxu0 0.0
      %315 = vmatprep.subr.mxu0 0.0
      %316 = vmatpush2.msra.mxu0 0.0
      %317 = vmatprep.subr.mxu0 0.0
      %318 = vmatpush2.msra.mxu0 0.0
      %319 = vmatprep.subr.mxu0 0.0
      %320 = vmatpush2.msra.mxu0 0.0
      %321 = vmatprep.subr.mxu0 0.0
      %322 = vmatpush2.msra.mxu0 0.0
      %323 = vmatprep.subr.mxu0 0.0
      %324 = vmatpush2.msra.mxu0 0.0
      %325 = vmatprep.mubr.f32.mxu0 0.0
      %326 = vmatmul.mubr.f32.gmra.mxu0 %v246
      %v327 = vpop.f32.mrf.mxu0
      %v328 = vadd.f32 %v242, %v327
      %v329 = vpop.f32.mrf.mxu0
      %330 = vmatprep.mubr.f32.mxu0 0.0
      %331 = vmatmul.mubr.f32.gmra.mxu0 %v249
      %v332 = vpop.f32.mrf.mxu0
      %v333 = vadd.f32 %v242, %v332
      %v334 = vpop.f32.mrf.mxu0
      %335 = vmatprep.mubr.f32.mxu0 0.0
      %336 = vmatmul.mubr.f32.gmra.mxu0 %v252
      %v337 = vpop.f32.mrf.mxu0
      %v338 = vadd.f32 %v242, %v337
      %v339 = vpop.f32.mrf.mxu0
      %340 = vmatprep.mubr.f32.mxu0 0.0
      %341 = vmatmul.mubr.f32.gmra.mxu0 %v255
      %v342 = vpop.f32.mrf.mxu0
      %v343 = vadd.f32 %v242, %v342
      %v344 = vpop.f32.mrf.mxu0
      %345 = vdwg.mxu0
      %vm346 = vcmask 261120
      %v347 = vsel %vm346, %v328, 0.0
      %348 = vadd.xlane.f32.xlu0 %v347
      %v349 = vpop.xlane.xlu0 %348
      %v350 = vsel %vm346, %v333, 0.0
      %351 = vadd.xlane.f32.xlu0 %v350
      %v352 = vpop.xlane.xlu0 %351
      %v353 = vsel %vm346, %v338, 0.0
      %354 = vadd.xlane.f32.xlu0 %v353
      %v355 = vpop.xlane.xlu0 %354
      %v356 = vsel %vm346, %v343, 0.0
      %357 = vadd.xlane.f32.xlu0 %v356
      %v358 = vpop.xlane.xlu0 %357
      %v359 = vmul.f32 %v349, 0.03125
      %v360 = vmul.f32 %v352, 0.03125
      %v361 = vmul.f32 %v355, 0.03125
      %v362 = vmul.f32 %v358, 0.03125
      %v363 = vsub.f32 %v328, %v359
      %v364 = vsub.f32 %v333, %v360
      %v365 = vsub.f32 %v338, %v361
      %v366 = vsub.f32 %v343, %v362
      %v367 = vmul.f32 %v363, %v363
      %v368 = vmul.f32 %v364, %v364
      %v369 = vmul.f32 %v365, %v365
      %v370 = vmul.f32 %v366, %v366
      %v371 = vsel %vm346, %v367, 0.0
      %372 = vadd.xlane.f32.xlu0 %v371
      %v373 = vpop.xlane.xlu0 %372
      %v374 = vsel %vm346, %v368, 0.0
      %375 = vadd.xlane.f32.xlu0 %v374
      %v376 = vpop.xlane.xlu0 %375
      %v377 = vsel %vm346, %v369, 0.0
      %378 = vadd.xlane.f32.xlu0 %v377
      %v379 = vpop.xlane.xlu0 %378
      %v380 = vsel %vm346, %v370, 0.0
      %381 = vadd.xlane.f32.xlu0 %v380
      %v382 = vpop.xlane.xlu0 %381
      %v383 = vmul.f32 %v373, 0.03125
      %v384 = vmul.f32 %v376, 0.03125
      %v385 = vmul.f32 %v379, 0.03125
      %v386 = vmul.f32 %v382, 0.03125
      %v387 = vadd.f32 %v383, 1e-05
      %v388 = vadd.f32 %v384, 1e-05
      %v389 = vadd.f32 %v385, 1e-05
      %v390 = vadd.f32 %v386, 1e-05
      %v391 = vrsqrt.pop %v387
      %v392 = vrsqrt.pop %v388
      %v393 = vrsqrt.pop %v389
      %v394 = vrsqrt.pop %v390
      %v395 = vmul.f32 %v363, %v391
      %v396 = vmul.f32 %v364, %v392
      %v397 = vmul.f32 %v365, %v393
      %v398 = vmul.f32 %v366, %v394
      %v399 = vld [vmem:[%s3] sm:$0x1]
      %v401 = vlaneseq
      %v402 = vshrl.u32 %v401, 7
      %v403 = vsub.s32 0, %v402
      %v404 = vrot.slane %v399, %v403
      %v406 = vmul.f32 %v395, %v404
      %v407 = vmul.f32 %v396, %v404
      %v408 = vmul.f32 %v397, %v404
      %v409 = vmul.f32 %v398, %v404
      %v410 = vld [vmem:[%s4] sm:$0x1]
      %v412 = vlaneseq
      %v413 = vshrl.u32 %v412, 7
      %v414 = vsub.s32 0, %v413
      %v415 = vrot.slane %v410, %v414
      %v417 = vadd.f32 %v406, %v415
      %v418 = vadd.f32 %v407, %v415
      %v419 = vadd.f32 %v408, %v415
      %v420 = vadd.f32 %v409, %v415
      %421 = vst.msk [vmem:[%s226] sm:$0xff] %vm346, %v417
      %422 = vst.msk [vmem:[%s226 + $0x8] sm:$0xff] %vm346, %v418
      %423 = vst.msk [vmem:[%s226 + $0x10] sm:$0xff] %vm346, %v419
      %424 = vst.msk [vmem:[%s226 + $0x18] sm:$0xff] %vm346, %v420
      %s425 = smul.u32 4, %s16
      %p426 = scmp.lt.s32.totalorder %s425, 15
      %s427 = scalar_select %p426, %s425, 15
      %s428 = smul.addr %s427, 8
      %s429 = scalar_lea.vmem %s5, %s428
      // Predicated region
      $region41: #{tpu_custom_call.1} parent=39 // pred_check
        %p430 = pneg %p144
      $region42: #{tpu_custom_call.1} parent=39 // pred_check_branch
        %432 = sbr.rel (%p430) target = $region44
      $region43: #{tpu_custom_call.1} parent=39 // pred_region
        %s433 = smul.u32 4, %s16
      $region44: #{tpu_custom_call.1} parent=39 // pred_fallthru
        _
    $region40: #{tpu_custom_call.1} parent=5 // pred_fallthru
      _
    %p434 = scmp.le.s32.totalorder 2, %s11
    // Predicated region
    $region45: #{tpu_custom_call.1} parent=5 // pred_check
      %p435 = pneg %p434
    $region46: #{tpu_custom_call.1} parent=5 // pred_check_branch
      %437 = sbr.rel (%p435) target = $region48
    $region47: #{tpu_custom_call.1} parent=5 // pred_region
      %s438 = ssub.s32 %s11, 2
      // Predicated region
      $region49: #{tpu_custom_call.1} parent=47 // pred_check
        %p439 = pneg %p150
      $region50: #{tpu_custom_call.1} parent=47 // pred_check_branch
        %441 = sbr.rel (%p439) target = $region52
      $region51: #{tpu_custom_call.1} parent=47 // pred_region
        %s442 = smul.u32 4, %s17
        %p443 = scmp.lt.s32.totalorder %s442, 15
        %s444 = scalar_select %p443, %s442, 15
        %s445 = smul.addr %s444, 8
        %s446 = scalar_lea.vmem %s5, %s445
      $region52: #{tpu_custom_call.1} parent=47 // pred_fallthru
        _
    $region48: #{tpu_custom_call.1} parent=5 // pred_fallthru
      _
  $region6: #{tpu_custom_call.1} parent=0 // loop_footer
    %s15 = sadd.s32 1, %s11
  $region7: #{tpu_custom_call.1} parent=0 // loop_footer_branch
    %10 = sbr.rel target = $region3
  $region8: #{tpu_custom_call.1} parent=0 // loop_exit
    _

</llo_original>
